<compile_context>
chip_gen: v5e
topology: v5e:2x2
jax: 0.10.0
libtpu: 0.0.40
codegen_flags: <defaults>
</compile_context>

<pallas_src>
import functools
import math

import jax
import jax.numpy as jnp
from jax.experimental import pallas as pl
from jax.experimental.pallas import tpu as pltpu


def _round_up(x, m):
    return ((x + m - 1) // m) * m


def _pick_tile(total, cap):
    """Largest multiple of 128 that divides `total` (a multiple of 128) and is <= cap."""
    t = min(cap, total)
    t -= t % 128
    while total % t:
        t -= 128
    return t


def _hw_config():
    """Per-generation tile caps / VMEM limits (conservative fallback)."""
    vmem = None
    try:
        info = pltpu.get_tpu_info()
        vmem = getattr(info, "vmem_capacity_bytes", None)
    except Exception:
        vmem = None
    if vmem is None:
        vmem = 64 * 1024 * 1024
    if vmem >= 100 * 1024 * 1024:        # v5e / v6e: 128 MiB VMEM
        return dict(tm_cap=512, tk_cap=1024,
                    vmem_limit=100 * 1024 * 1024,
                    xw_resident_cap=24 * 1024 * 1024)
    # v7x (64 MiB physical) or unknown: stay conservative.
    return dict(tm_cap=256, tk_cap=512,
                vmem_limit=48 * 1024 * 1024,
                xw_resident_cap=8 * 1024 * 1024)


# ---------------------------------------------------------------------------
# Kernels
# ---------------------------------------------------------------------------

def _xw_kernel(x_ref, d_ref, w_ref, xw_ref, acc_ref):
    """Stage 1: XW = (d[:, None] * X) @ W, k-tiled over F_in."""
    k = pl.program_id(1)

    @pl.when(k == 0)
    def _():
        acc_ref[...] = jnp.zeros_like(acc_ref)

    # Column scale of A folded into X (f32 VPU), then bf16 operands for the MXU.
    xs = (x_ref[...] * d_ref[...]).astype(jnp.bfloat16)
    acc_ref[...] += jnp.dot(xs, w_ref[...], preferred_element_type=jnp.float32)

    @pl.when(k == pl.num_programs(1) - 1)
    def _():
        xw_ref[...] = acc_ref[...].astype(xw_ref.dtype)


def _make_aggregate_kernel(xw_resident, tk):
    """Stage 2: out_block = d_row[:, None] * (A @ XW) + bias, k-tiled over N."""

    def kernel(a_ref, xw_ref, d_ref, b_ref, o_ref, acc_ref):
        k = pl.program_id(1)

        @pl.when(k == 0)
        def _():
            acc_ref[...] = jnp.zeros_like(acc_ref)

        if xw_resident:
            # XW fully resident in VMEM; take the k-th (tk, fp) slab.
            start = pl.multiple_of(k * tk, 128)
            xw_blk = xw_ref[pl.ds(start, tk), :]
        else:
            xw_blk = xw_ref[...]

        # A streamed in its storage dtype (int8/bf16); VPU cast just before the dot.
        a_blk = a_ref[...].astype(xw_blk.dtype)
        acc_ref[...] += jnp.dot(a_blk, xw_blk, preferred_element_type=jnp.float32)

        @pl.when(k == pl.num_programs(1) - 1)
        def _():
            o_ref[...] = (acc_ref[...] * d_ref[...] + b_ref[...]).astype(o_ref.dtype)

    return kernel


# ---------------------------------------------------------------------------
# Wrappers
# ---------------------------------------------------------------------------

def prepare_adjacency(A, D, a_dtype=jnp.bfloat16):
    """Pad + cast the static graph operands once; cache the result across
    layers / training steps (A, D do not change).

    Only the diagonal of D is used: GCN's D = diag(deg)^-1/2 is diagonal by
    construction. For binary (0/1) adjacency, a_dtype=jnp.int8 halves the
    dominant HBM stream of the aggregation stage.
    """
    # TODO(synk): a general dense (non-diagonal) D would need the full D@A@D chain.
    N = A.shape[0]
    n_pad = _round_up(N, 128)
    d = D if D.ndim == 1 else jnp.diagonal(D)
    d_p = jnp.pad(d.astype(jnp.float32).reshape(N, 1), ((0, n_pad - N), (0, 0)))
    a_p = jnp.pad(A.astype(a_dtype), ((0, n_pad - N), (0, n_pad - N)))
    return a_p, d_p, N


@functools.partial(jax.jit, static_argnames=("xw_dtype", "xw_resident"))
def _gcn_forward_padded(x_p, a_p, d_p, w_p, b_p, *, xw_dtype=jnp.bfloat16,
                        xw_resident=None):
    n_pad, kp = x_p.shape
    fp = w_p.shape[1]
    cfg = _hw_config()

    tm = _pick_tile(n_pad, cfg["tm_cap"])    # output row tile
    tk = _pick_tile(n_pad, cfg["tk_cap"])    # contraction tile over N (stage 2)
    tk1 = _pick_tile(kp, 512)                # contraction tile over F_in (stage 1)

    # ---- Stage 1: XW = (d * X) @ W  (small; bf16 MXU, f32 accumulate) ----
    xw = pl.pallas_call(
        _xw_kernel,
        grid=(n_pad // tm, kp // tk1),
        in_specs=[
            pl.BlockSpec((tm, tk1), lambda i, k: (i, k)),   # X tile (f32)
            pl.BlockSpec((tm, 1), lambda i, k: (i, 0)),     # d (column scale)
            pl.BlockSpec((tk1, fp), lambda i, k: (k, 0)),   # W tile (bf16)
        ],
        out_specs=pl.BlockSpec((tm, fp), lambda i, k: (i, 0)),
        out_shape=jax.ShapeDtypeStruct((n_pad, fp), xw_dtype),
        scratch_shapes=[pltpu.VMEM((tm, fp), jnp.float32)],
        compiler_params=pltpu.CompilerParams(
            dimension_semantics=("parallel", "arbitrary"),
            vmem_limit_bytes=cfg["vmem_limit"]),
    )(x_p, d_p, w_p)

    # ---- Stage 2: out = d_row * (A @ XW) + bias  (dominant; mem-bound on A) ----
    xw_bytes = n_pad * fp * xw.dtype.itemsize
    if xw_resident is None:
        xw_resident = xw_bytes <= cfg["xw_resident_cap"]
    if xw_resident:
        xw_spec = pl.BlockSpec((n_pad, fp), lambda i, k: (0, 0))   # DMA'd once
        xw_reads = 1
    else:
        xw_spec = pl.BlockSpec((tk, fp), lambda i, k: (k, 0))      # k-tiled
        xw_reads = n_pad // tm

    flops = 2 * n_pad * n_pad * fp
    bytes_accessed = (a_p.size * a_p.dtype.itemsize
                      + xw_reads * xw_bytes
                      + n_pad * fp * 4 + d_p.size * 4 + b_p.size * 4)

    out_p = pl.pallas_call(
        _make_aggregate_kernel(xw_resident, tk),
        grid=(n_pad // tm, n_pad // tk),
        in_specs=[
            pl.BlockSpec((tm, tk), lambda i, k: (i, k)),   # A tile (int8/bf16)
            xw_spec,                                       # XW
            pl.BlockSpec((tm, 1), lambda i, k: (i, 0)),    # d (row scale)
            pl.BlockSpec((1, fp), lambda i, k: (0, 0)),    # bias (2-D, resident)
        ],
        out_specs=pl.BlockSpec((tm, fp), lambda i, k: (i, 0)),
        out_shape=jax.ShapeDtypeStruct((n_pad, fp), jnp.float32),
        scratch_shapes=[pltpu.VMEM((tm, fp), jnp.float32)],
        compiler_params=pltpu.CompilerParams(
            dimension_semantics=("parallel", "arbitrary"),
            vmem_limit_bytes=cfg["vmem_limit"]),
        cost_estimate=pl.CostEstimate(
            flops=flops, transcendentals=0, bytes_accessed=bytes_accessed),
    )(a_p, xw, d_p, b_p)
    return out_p


def graph_convolution_prepared(x, weight, bias, prepared, *,
                               xw_dtype=jnp.bfloat16, xw_resident=None):
    """Forward pass given prepare_adjacency() output (the fast, cached path)."""
    a_p, d_p, n_nodes = prepared
    n_pad = a_p.shape[0]
    f_in = x.shape[1]
    f_out = weight.shape[1]
    kp = _round_up(max(f_in, 1), 128)
    fp = _round_up(max(f_out, 1), 128)

    x_p = jnp.pad(x.astype(jnp.float32), ((0, n_pad - n_nodes), (0, kp - f_in)))
    w_p = jnp.pad(weight.astype(jnp.bfloat16), ((0, kp - f_in), (0, fp - f_out)))
    if bias is None:
        b_p = jnp.zeros((1, fp), jnp.float32)
    else:
        b_p = jnp.pad(bias.astype(jnp.float32).reshape(1, f_out),
                      ((0, 0), (0, fp - f_out)))

    out_p = _gcn_forward_padded(x_p, a_p, d_p, w_p, b_p,
                                xw_dtype=xw_dtype, xw_resident=xw_resident)
    return out_p[:n_nodes, :f_out].astype(x.dtype)


def graph_convolution(x, A, D, weight, bias=None, *, a_dtype=jnp.bfloat16,
                      xw_dtype=jnp.bfloat16):
    """One-shot convenience wrapper (pads/casts A on this call).

    For repeated use (A, D are static across layers/steps) call
    prepare_adjacency() once and use graph_convolution_prepared() to avoid
    re-streaming A through the pad/cast pre-pass every call.
    """
    prepared = prepare_adjacency(A, D, a_dtype=a_dtype)
    return graph_convolution_prepared(x, weight, bias, prepared, xw_dtype=xw_dtype)


def init_gcn_params(key, in_features, out_features, bias=False):
    """Deterministic parameter init matching GraphConvolution.reset_parameters."""
    stdv = 1.0 / math.sqrt(out_features)
    kw, kb = jax.random.split(key)
    weight = jax.random.uniform(
        kw, (in_features, out_features), jnp.float32, minval=-stdv, maxval=stdv
    )
    if bias:
        b = jax.random.uniform(
            kb, (out_features,), jnp.float32, minval=-stdv, maxval=stdv
        )
        return weight, b
    return weight, None


if __name__ == "__main__":
    key = jax.random.PRNGKey(0)
    k_adj, k_x, k_w, k_wb = jax.random.split(key, 4)

    # Small GCN-flavoured example: N nodes, F_in -> F_out features.
    N, F_IN, F_OUT = 64, 32, 16

    # Symmetric 0/1 adjacency with self-loops, and D = diag(deg)^(-1/2).
    a_rand = jax.random.bernoulli(k_adj, p=0.2, shape=(N, N)).astype(jnp.float32)
    A = jnp.clip(a_rand + a_rand.T + jnp.eye(N, dtype=jnp.float32), 0.0, 1.0)
    deg = jnp.sum(A, axis=1)
    D = jnp.diag(1.0 / jnp.sqrt(deg)).astype(jnp.float32)

    x = jax.random.normal(k_x, (N, F_IN), dtype=jnp.float32)

    # Adjacency is binary -> stream it as int8 (halves the dominant HBM
    # stream); pad/cast once and reuse across calls.
    prepared = prepare_adjacency(A, D, a_dtype=jnp.int8)

    # Module default: bias=False.
    weight, bias = init_gcn_params(k_w, F_IN, F_OUT, bias=False)
    out = jax.block_until_ready(
        graph_convolution_prepared(x, weight, bias, prepared))
    ref = D @ A @ D @ x @ weight
    assert out.shape == (N, F_OUT), out.shape
    assert jnp.allclose(out, ref, atol=2e-2, rtol=2e-2), float(
        jnp.max(jnp.abs(out - ref)))

    # Bias path.
    weight_b, bias_b = init_gcn_params(k_wb, F_IN, F_OUT, bias=True)
    out_b = jax.block_until_ready(
        graph_convolution_prepared(x, weight_b, bias_b, prepared))
    ref_b = D @ A @ D @ x @ weight_b + bias_b
    assert jnp.allclose(out_b, ref_b, atol=2e-2, rtol=2e-2), float(
        jnp.max(jnp.abs(out_b - ref_b)))

    # Exercise the k-tiled (non-resident) XW path.
    out_tiled = jax.block_until_ready(graph_convolution_prepared(
        x, weight, bias, prepared, xw_resident=False))
    assert jnp.allclose(out_tiled, ref, atol=2e-2, rtol=2e-2), float(
        jnp.max(jnp.abs(out_tiled - ref)))

    # Exercise the one-shot wrapper with the f32-XW (accuracy) path.
    out_precise = jax.block_until_ready(graph_convolution(
        x, A, D, weight_b, bias_b, xw_dtype=jnp.float32))
    assert jnp.allclose(out_precise, ref_b, atol=2e-2, rtol=2e-2), float(
        jnp.max(jnp.abs(out_precise - ref_b)))

    print("KERNEL_OK")
</pallas_src>

<mosaic_0001>
module attributes {stable_mosaic.version = 11 : i64} {
  func.func @_xw_kernel(%arg0: i32, %arg1: i32, %arg2: memref<128x128xf32, #tpu.memory_space<vmem>>, %arg3: memref<128x1xf32, #tpu.memory_space<vmem>>, %arg4: memref<128x128xbf16, #tpu.memory_space<vmem>>, %arg5: memref<128x128xbf16, #tpu.memory_space<vmem>>, %arg6: memref<128x128xf32, #tpu.memory_space<vmem>>) attributes {dimension_semantics = [#tpu.dimension_semantics<parallel>, #tpu.dimension_semantics<arbitrary>], iteration_bounds = array<i64: 1, 1>, scalar_prefetch = 0 : i64, scratch_operands = 1 : i64, tpu.core_type = #tpu.core_type<tc>, window_params = [{transform_indices = @transform_0, window_bounds = array<i64: 128, 128>}, {transform_indices = @transform_1, window_bounds = array<i64: 128, 1>}, {transform_indices = @transform_2, window_bounds = array<i64: 128, 128>}, {transform_indices = @transform_3, window_bounds = array<i64: 128, 128>}]} {
    %c0_i32 = arith.constant 0 : i32
    %0 = arith.cmpi eq, %arg1, %c0_i32 : i32
    %1 = arith.extui %0 : i1 to i32
    %c0_i32_0 = arith.constant 0 : i32
    %2 = arith.cmpi ne, %1, %c0_i32_0 : i32
    scf.if %2 {
      %cst_12 = arith.constant 0.000000e+00 : f32
      %16 = vector.broadcast %cst_12 : f32 to vector<128x128xf32>
      %c0_13 = arith.constant 0 : index
      %c0_14 = arith.constant 0 : index
      %17 = vector.load %arg6[%c0_13, %c0_14] : memref<128x128xf32, #tpu.memory_space<vmem>>, vector<128x128xf32>
      tpu.vector_store %arg6[%c0_13, %c0_14], %16 {strides = array<i32>} : memref<128x128xf32, #tpu.memory_space<vmem>>, vector<128x128xf32>,
    } else {
    }
    %c0 = arith.constant 0 : index
    %c0_1 = arith.constant 0 : index
    %3 = vector.load %arg2[%c0, %c0_1] : memref<128x128xf32, #tpu.memory_space<vmem>>, vector<128x128xf32>
    %c0_2 = arith.constant 0 : index
    %c0_3 = arith.constant 0 : index
    %4 = vector.load %arg3[%c0_2, %c0_3] : memref<128x1xf32, #tpu.memory_space<vmem>>, vector<128x1xf32>
    %5 = vector.broadcast %4 : vector<128x1xf32> to vector<128x128xf32>
    %6 = arith.mulf %3, %5 : vector<128x128xf32>
    %7 = arith.truncf %6 : vector<128x128xf32> to vector<128x128xbf16>
    %c0_4 = arith.constant 0 : index
    %c0_5 = arith.constant 0 : index
    %8 = vector.load %arg6[%c0_4, %c0_5] : memref<128x128xf32, #tpu.memory_space<vmem>>, vector<128x128xf32>
    %c0_6 = arith.constant 0 : index
    %c0_7 = arith.constant 0 : index
    %9 = vector.load %arg4[%c0_6, %c0_7] : memref<128x128xbf16, #tpu.memory_space<vmem>>, vector<128x128xbf16>
    %cst = arith.constant dense<0.000000e+00> : vector<128x128xf32>
    %10 = tpu.matmul %7, %9, %cst {dimension_numbers = #tpu.dot_dimension_numbers<[1], [0], [0], [1], [0, 0, 1, 1], [], []>} : vector<128x128xbf16>, vector<128x128xbf16>, vector<128x128xf32> -> vector<128x128xf32>
    %11 = arith.addf %8, %10 : vector<128x128xf32>
    %c0_8 = arith.constant 0 : index
    %c0_9 = arith.constant 0 : index
    %12 = vector.load %arg6[%c0_8, %c0_9] : memref<128x128xf32, #tpu.memory_space<vmem>>, vector<128x128xf32>
    tpu.vector_store %arg6[%c0_8, %c0_9], %11 {strides = array<i32>} : memref<128x128xf32, #tpu.memory_space<vmem>>, vector<128x128xf32>,
    %c0_i32_10 = arith.constant 0 : i32
    %13 = arith.cmpi eq, %arg1, %c0_i32_10 : i32
    %14 = arith.extui %13 : i1 to i32
    %c0_i32_11 = arith.constant 0 : i32
    %15 = arith.cmpi ne, %14, %c0_i32_11 : i32
    scf.if %15 {
      %c0_12 = arith.constant 0 : index
      %c0_13 = arith.constant 0 : index
      %16 = vector.load %arg6[%c0_12, %c0_13] : memref<128x128xf32, #tpu.memory_space<vmem>>, vector<128x128xf32>
      %17 = arith.truncf %16 : vector<128x128xf32> to vector<128x128xbf16>
      %c0_14 = arith.constant 0 : index
      %c0_15 = arith.constant 0 : index
      %18 = vector.load %arg5[%c0_14, %c0_15] : memref<128x128xbf16, #tpu.memory_space<vmem>>, vector<128x128xbf16>
      tpu.vector_store %arg5[%c0_14, %c0_15], %17 {strides = array<i32>} : memref<128x128xbf16, #tpu.memory_space<vmem>>, vector<128x128xbf16>,
    } else {
    }
    return
  }
  func.func @transform_0(%arg0: i32, %arg1: i32) -> (i32, i32) {
    %c0_i32 = arith.constant 0 : i32
    return %arg0, %arg1 : i32, i32
  }
  func.func @transform_1(%arg0: i32, %arg1: i32) -> (i32, i32) {
    %c0_i32 = arith.constant 0 : i32
    %c0_i32_0 = arith.constant 0 : i32
    return %arg0, %c0_i32 : i32, i32
  }
  func.func @transform_2(%arg0: i32, %arg1: i32) -> (i32, i32) {
    %c0_i32 = arith.constant 0 : i32
    %c0_i32_0 = arith.constant 0 : i32
    return %arg1, %c0_i32 : i32, i32
  }
  func.func @transform_3(%arg0: i32, %arg1: i32) -> (i32, i32) {
    %c0_i32 = arith.constant 0 : i32
    %c0_i32_0 = arith.constant 0 : i32
    return %arg0, %c0_i32 : i32, i32
  }
}

module attributes {stable_mosaic.version = 11 : i64} {
  func.func @kernel(%arg0: i32, %arg1: i32, %arg2: memref<128x128xi8, #tpu.memory_space<vmem>>, %arg3: memref<128x128xbf16, #tpu.memory_space<vmem>>, %arg4: memref<128x1xf32, #tpu.memory_space<vmem>>, %arg5: memref<1x128xf32, #tpu.memory_space<vmem>>, %arg6: memref<128x128xf32, #tpu.memory_space<vmem>>, %arg7: memref<128x128xf32, #tpu.memory_space<vmem>>) attributes {dimension_semantics = [#tpu.dimension_semantics<parallel>, #tpu.dimension_semantics<arbitrary>], iteration_bounds = array<i64: 1, 1>, scalar_prefetch = 0 : i64, scratch_operands = 1 : i64, tpu.core_type = #tpu.core_type<tc>, window_params = [{transform_indices = @transform_0, window_bounds = array<i64: 128, 128>}, {pipeline_mode = #tpu.pipeline_mode<synchronous>, transform_indices = @transform_1, window_bounds = array<i64: 128, 128>}, {transform_indices = @transform_2, window_bounds = array<i64: 128, 1>}, {pipeline_mode = #tpu.pipeline_mode<synchronous>, transform_indices = @transform_3, window_bounds = array<i64: 1, 128>}, {transform_indices = @transform_4, window_bounds = array<i64: 128, 128>}]} {
    %c0_i32 = arith.constant 0 : i32
    %0 = arith.cmpi eq, %arg1, %c0_i32 : i32
    %1 = arith.extui %0 : i1 to i32
    %c0_i32_0 = arith.constant 0 : i32
    %2 = arith.cmpi ne, %1, %c0_i32_0 : i32
    scf.if %2 {
      %cst_9 = arith.constant 0.000000e+00 : f32
      %16 = vector.broadcast %cst_9 : f32 to vector<128x128xf32>
      %c0_10 = arith.constant 0 : index
      %c0_11 = arith.constant 0 : index
      %17 = vector.load %arg7[%c0_10, %c0_11] : memref<128x128xf32, #tpu.memory_space<vmem>>, vector<128x128xf32>
      tpu.vector_store %arg7[%c0_10, %c0_11], %16 {strides = array<i32>} : memref<128x128xf32, #tpu.memory_space<vmem>>, vector<128x128xf32>,
    } else {
    }
    %c128_i32 = arith.constant 128 : i32
    %3 = arith.muli %arg1, %c128_i32 : i32
    %4 = tpu.assume_multiple %3, 128 : i32
    %5 = arith.index_cast %4 : i32 to index
    %c0 = arith.constant 0 : index
    %6 = vector.load %arg3[%5, %c0] : memref<128x128xbf16, #tpu.memory_space<vmem>>, vector<128x128xbf16>
    %c0_1 = arith.constant 0 : index
    %c0_2 = arith.constant 0 : index
    %7 = vector.load %arg2[%c0_1, %c0_2] : memref<128x128xi8, #tpu.memory_space<vmem>>, vector<128x128xi8>
    %8 = arith.sitofp %7 : vector<128x128xi8> to vector<128x128xbf16>
    %c0_3 = arith.constant 0 : index
    %c0_4 = arith.constant 0 : index
    %9 = vector.load %arg7[%c0_3, %c0_4] : memref<128x128xf32, #tpu.memory_space<vmem>>, vector<128x128xf32>
    %cst = arith.constant dense<0.000000e+00> : vector<128x128xf32>
    %10 = tpu.matmul %8, %6, %cst {dimension_numbers = #tpu.dot_dimension_numbers<[1], [0], [0], [1], [0, 0, 1, 1], [], []>} : vector<128x128xbf16>, vector<128x128xbf16>, vector<128x128xf32> -> vector<128x128xf32>
    %11 = arith.addf %9, %10 : vector<128x128xf32>
    %c0_5 = arith.constant 0 : index
    %c0_6 = arith.constant 0 : index
    %12 = vector.load %arg7[%c0_5, %c0_6] : memref<128x128xf32, #tpu.memory_space<vmem>>, vector<128x128xf32>
    tpu.vector_store %arg7[%c0_5, %c0_6], %11 {strides = array<i32>} : memref<128x128xf32, #tpu.memory_space<vmem>>, vector<128x128xf32>,
    %c0_i32_7 = arith.constant 0 : i32
    %13 = arith.cmpi eq, %arg1, %c0_i32_7 : i32
    %14 = arith.extui %13 : i1 to i32
    %c0_i32_8 = arith.constant 0 : i32
    %15 = arith.cmpi ne, %14, %c0_i32_8 : i32
    scf.if %15 {
      %c0_9 = arith.constant 0 : index
      %c0_10 = arith.constant 0 : index
      %16 = vector.load %arg7[%c0_9, %c0_10] : memref<128x128xf32, #tpu.memory_space<vmem>>, vector<128x128xf32>
      %c0_11 = arith.constant 0 : index
      %c0_12 = arith.constant 0 : index
      %17 = vector.load %arg4[%c0_11, %c0_12] : memref<128x1xf32, #tpu.memory_space<vmem>>, vector<128x1xf32>
      %18 = vector.broadcast %17 : vector<128x1xf32> to vector<128x128xf32>
      %19 = arith.mulf %16, %18 : vector<128x128xf32>
      %c0_13 = arith.constant 0 : index
      %c0_14 = arith.constant 0 : index
      %20 = vector.load %arg5[%c0_13, %c0_14] : memref<1x128xf32, #tpu.memory_space<vmem>>, vector<1x128xf32>
      %21 = vector.broadcast %20 : vector<1x128xf32> to vector<128x128xf32>
      %22 = arith.addf %19, %21 : vector<128x128xf32>
      %c0_15 = arith.constant 0 : index
      %c0_16 = arith.constant 0 : index
      %23 = vector.load %arg6[%c0_15, %c0_16] : memref<128x128xf32, #tpu.memory_space<vmem>>, vector<128x128xf32>
      tpu.vector_store %arg6[%c0_15, %c0_16], %22 {strides = array<i32>} : memref<128x128xf32, #tpu.memory_space<vmem>>, vector<128x128xf32>,
    } else {
    }
    return
  }
  func.func @transform_0(%arg0: i32, %arg1: i32) -> (i32, i32) {
    %c0_i32 = arith.constant 0 : i32
    return %arg0, %arg1 : i32, i32
  }
  func.func @transform_1(%arg0: i32, %arg1: i32) -> (i32, i32) {
    %c0_i32 = arith.constant 0 : i32
    %c0_i32_0 = arith.constant 0 : i32
    %c0_i32_1 = arith.constant 0 : i32
    return %c0_i32, %c0_i32_0 : i32, i32
  }
  func.func @transform_2(%arg0: i32, %arg1: i32) -> (i32, i32) {
    %c0_i32 = arith.constant 0 : i32
    %c0_i32_0 = arith.constant 0 : i32
    return %arg0, %c0_i32 : i32, i32
  }
  func.func @transform_3(%arg0: i32, %arg1: i32) -> (i32, i32) {
    %c0_i32 = arith.constant 0 : i32
    %c0_i32_0 = arith.constant 0 : i32
    %c0_i32_1 = arith.constant 0 : i32
    return %c0_i32, %c0_i32_0 : i32, i32
  }
  func.func @transform_4(%arg0: i32, %arg1: i32) -> (i32, i32) {
    %c0_i32 = arith.constant 0 : i32
    %c0_i32_0 = arith.constant 0 : i32
    return %arg0, %c0_i32 : i32, i32
  }
}

</mosaic_0001>

<llo_original>
// kernel: _gcn_forward_padded.2
$region0: #{_gcn_forward_padded.2}
  #allocation0 [shape = 'u32[]', space=smem, size = 0x4, offset = 0x4, fixed_abs, tag = 'smem constant byte address 0x4 - core index']
  #allocation1 [shape = 'u32[72,128]{1,0:T(1,128)}', space=vmem, size = 0x9000, scoped, tag = 'internal scratch']
  #allocation2 [shape = 'f32[128,128]{1,0:T(8,128)}', space=vmem, size = 0x10000, scoped, tag = 'scratch operand']
  %s0 = inlined_call_operand.hbm [shape: f32[128,128], index: 0, kind: input, shape index: {}]
  %s1 = inlined_call_operand.vmem [shape: f32[128,1], index: 1, kind: input, shape index: {}]
  %s2 = inlined_call_operand.vmem [shape: bf16[128,128], index: 2, kind: input, shape index: {}]
  %s3 = inlined_call_operand.vmem [shape: bf16[128,128], index: 3, kind: output, shape index: {}]
  %s4 = sld [smem:[#allocation0]]
  $region34: #{_gcn_forward_padded.2} parent=0
    _
  %s6 = ssub.s32 1, %s4
  %s7 = scalar_select 0, %s6, %s4
  $region1: #{_gcn_forward_padded.2} parent=0
    #allocation3 [shape = 'u8[65536]{0}', space=vmem, size = 0x10000, scoped, tag = 'input window, operand 0, single buffered']
    #allocation4 [shape = 's32[1]{0}', space=sflag, size = 0x4, scoped, tag = 'scoped memory for _gcn_forward_padded.2']
    %8 = vsyncpa [#allocation4], 0
    // Predicated region
    $region2: #{_gcn_forward_padded.2} parent=1 // pred_check
      _
    $region3: #{_gcn_forward_padded.2} parent=1 // pred_check_branch
      %10 = sbr.rel (0) target = $region5
    $region4: #{_gcn_forward_padded.2} parent=1 // pred_region
      %12 = vsyncadd [#allocation4], 0
      %s13 = sshll.u32 %s0, 4
      %s14 = int_to_ptr.hbm [resolvable:$true] %s13
      %s15 = sshll.u32 [#allocation3], 4
      %s16 = int_to_ptr.vmem [resolvable:$true] %s15
      %21 = dma.hbm_to_vmem [thread:$0]  %s14, 2048, %s16, [#allocation4], 128, 128, 8
    $region5: #{_gcn_forward_padded.2} parent=1 // pred_fallthru
      _
    // Predicated region
    $region6: #{_gcn_forward_padded.2} parent=1 // pred_check
      _
    $region7: #{_gcn_forward_padded.2} parent=1 // pred_check_branch
      %23 = sbr.rel (0) target = $region9
    $region8: #{_gcn_forward_padded.2} parent=1 // pred_region
      _
    $region9: #{_gcn_forward_padded.2} parent=1 // pred_fallthru
      _
    // Predicated region
    $region10: #{_gcn_forward_padded.2} parent=1 // pred_check
      _
    $region11: #{_gcn_forward_padded.2} parent=1 // pred_check_branch
      %25 = sbr.rel (0) target = $region13
    $region12: #{_gcn_forward_padded.2} parent=1 // pred_region
      _
    $region13: #{_gcn_forward_padded.2} parent=1 // pred_fallthru
      _
    // Predicated region
    $region14: #{_gcn_forward_padded.2} parent=1 // pred_check
      _
    $region15: #{_gcn_forward_padded.2} parent=1 // pred_check_branch
      %27 = sbr.rel (0) target = $region17
    $region16: #{_gcn_forward_padded.2} parent=1 // pred_region
      %29 = dma.done [#allocation4], 2048
    $region17: #{_gcn_forward_padded.2} parent=1 // pred_fallthru
      _
    %p30 = scmp.eq.s32.totalorder 0, 0
    // Predicated region
    $region18: #{_gcn_forward_padded.2} parent=1 // pred_check
      %p31 = pneg %p30
    $region19: #{_gcn_forward_padded.2} parent=1 // pred_check_branch
      %33 = sbr.rel (%p31) target = $region21
    $region20: #{_gcn_forward_padded.2} parent=1 // pred_region
      %34 = vst [vmem:[#allocation2] sm:$0xff] 0.0
      %35 = vst [vmem:[#allocation2 + $0x8] sm:$0xff] 0.0
      %36 = vst [vmem:[#allocation2 + $0x10] sm:$0xff] 0.0
      %37 = vst [vmem:[#allocation2 + $0x18] sm:$0xff] 0.0
      %38 = vst [vmem:[#allocation2 + $0x20] sm:$0xff] 0.0
      %39 = vst [vmem:[#allocation2 + $0x28] sm:$0xff] 0.0
      %40 = vst [vmem:[#allocation2 + $0x30] sm:$0xff] 0.0
      %41 = vst [vmem:[#allocation2 + $0x38] sm:$0xff] 0.0
      %42 = vst [vmem:[#allocation2 + $0x40] sm:$0xff] 0.0
      %43 = vst [vmem:[#allocation2 + $0x48] sm:$0xff] 0.0
      %44 = vst [vmem:[#allocation2 + $0x50] sm:$0xff] 0.0
      %45 = vst [vmem:[#allocation2 + $0x58] sm:$0xff] 0.0
      %46 = vst [vmem:[#allocation2 + $0x60] sm:$0xff] 0.0
      %47 = vst [vmem:[#allocation2 + $0x68] sm:$0xff] 0.0
      %48 = vst [vmem:[#allocation2 + $0x70] sm:$0xff] 0.0
      %49 = vst [vmem:[#allocation2 + $0x78] sm:$0xff] 0.0
    $region21: #{_gcn_forward_padded.2} parent=1 // pred_fallthru
      _
    %v50 = vld [vmem:[#allocation3] sm:$0xff]
    %v51 = vld [vmem:[#allocation3 + $0x8] sm:$0xff]
    %v52 = vld [vmem:[#allocation3 + $0x10] sm:$0xff]
    %v53 = vld [vmem:[#allocation3 + $0x18] sm:$0xff]
    %v54 = vld [vmem:[#allocation3 + $0x20] sm:$0xff]
    %v55 = vld [vmem:[#allocation3 + $0x28] sm:$0xff]
    %v56 = vld [vmem:[#allocation3 + $0x30] sm:$0xff]
    %v57 = vld [vmem:[#allocation3 + $0x38] sm:$0xff]
    %v58 = vld [vmem:[#allocation3 + $0x40] sm:$0xff]
    %v59 = vld [vmem:[#allocation3 + $0x48] sm:$0xff]
    %v60 = vld [vmem:[#allocation3 + $0x50] sm:$0xff]
    %v61 = vld [vmem:[#allocation3 + $0x58] sm:$0xff]
    %v62 = vld [vmem:[#allocation3 + $0x60] sm:$0xff]
    %v63 = vld [vmem:[#allocation3 + $0x68] sm:$0xff]
    %v64 = vld [vmem:[#allocation3 + $0x70] sm:$0xff]
    %v65 = vld [vmem:[#allocation3 + $0x78] sm:$0xff]
    %v66 = vld [vmem:[%s1] sm:$0xff]
    %v67 = vld [vmem:[%s1 + $0x8] sm:$0xff]
    %v68 = vld [vmem:[%s1 + $0x10] sm:$0xff]
    %v69 = vld [vmem:[%s1 + $0x18] sm:$0xff]
    %v70 = vld [vmem:[%s1 + $0x20] sm:$0xff]
    %v71 = vld [vmem:[%s1 + $0x28] sm:$0xff]
    %v72 = vld [vmem:[%s1 + $0x30] sm:$0xff]
    %v73 = vld [vmem:[%s1 + $0x38] sm:$0xff]
    %v74 = vld [vmem:[%s1 + $0x40] sm:$0xff]
    %v75 = vld [vmem:[%s1 + $0x48] sm:$0xff]
    %v76 = vld [vmem:[%s1 + $0x50] sm:$0xff]
    %v77 = vld [vmem:[%s1 + $0x58] sm:$0xff]
    %v78 = vld [vmem:[%s1 + $0x60] sm:$0xff]
    %v79 = vld [vmem:[%s1 + $0x68] sm:$0xff]
    %v80 = vld [vmem:[%s1 + $0x70] sm:$0xff]
    %v81 = vld [vmem:[%s1 + $0x78] sm:$0xff]
    %83 = vset.pattern.permute.xlu0 0
    %84 = vperm.xlu0 %83, %v66
    %v85 = vpop.permute.xlu0 %84
    %88 = vset.pattern.permute.xlu0 0
    %89 = vperm.xlu0 %88, %v67
    %v90 = vpop.permute.xlu0 %89
    %93 = vset.pattern.permute.xlu0 0
    %94 = vperm.xlu0 %93, %v68
    %v95 = vpop.permute.xlu0 %94
    %98 = vset.pattern.permute.xlu0 0
    %99 = vperm.xlu0 %98, %v69
    %v100 = vpop.permute.xlu0 %99
    %103 = vset.pattern.permute.xlu0 0
    %104 = vperm.xlu0 %103, %v70
    %v105 = vpop.permute.xlu0 %104
    %108 = vset.pattern.permute.xlu0 0
    %109 = vperm.xlu0 %108, %v71
    %v110 = vpop.permute.xlu0 %109
    %113 = vset.pattern.permute.xlu0 0
    %114 = vperm.xlu0 %113, %v72
    %v115 = vpop.permute.xlu0 %114
    %118 = vset.pattern.permute.xlu0 0
    %119 = vperm.xlu0 %118, %v73
    %v120 = vpop.permute.xlu0 %119
    %123 = vset.pattern.permute.xlu0 0
    %124 = vperm.xlu0 %123, %v74
    %v125 = vpop.permute.xlu0 %124
    %128 = vset.pattern.permute.xlu0 0
    %129 = vperm.xlu0 %128, %v75
    %v130 = vpop.permute.xlu0 %129
    %133 = vset.pattern.permute.xlu0 0
    %134 = vperm.xlu0 %133, %v76
    %v135 = vpop.permute.xlu0 %134
    %138 = vset.pattern.permute.xlu0 0
    %139 = vperm.xlu0 %138, %v77
    %v140 = vpop.permute.xlu0 %139
    %143 = vset.pattern.permute.xlu0 0
    %144 = vperm.xlu0 %143, %v78
    %v145 = vpop.permute.xlu0 %144
    %148 = vset.pattern.permute.xlu0 0
    %149 = vperm.xlu0 %148, %v79
    %v150 = vpop.permute.xlu0 %149
    %153 = vset.pattern.permute.xlu0 0
    %154 = vperm.xlu0 %153, %v80
    %v155 = vpop.permute.xlu0 %154
    %158 = vset.pattern.permute.xlu0 0
    %159 = vperm.xlu0 %158, %v81
    %v160 = vpop.permute.xlu0 %159
    %v162 = vmul.f32 %v50, %v85
    %v163 = vmul.f32 %v51, %v90
    %v164 = vmul.f32 %v52, %v95
    %v165 = vmul.f32 %v53, %v100
    %v166 = vmul.f32 %v54, %v105
    %v167 = vmul.f32 %v55, %v110
    %v168 = vmul.f32 %v56, %v115
    %v169 = vmul.f32 %v57, %v120
    %v170 = vmul.f32 %v58, %v125
    %v171 = vmul.f32 %v59, %v130
    %v172 = vmul.f32 %v60, %v135
    %v173 = vmul.f32 %v61, %v140
    %v174 = vmul.f32 %v62, %v145
    %v175 = vmul.f32 %v63, %v150
    %v176 = vmul.f32 %v64, %v155
    %v177 = vmul.f32 %v65, %v160
    %v178 = vpack.c.bf16 %v163, %v162
    %v179 = vpack.c.bf16 %v165, %v164
    %v180 = vpack.c.bf16 %v167, %v166
    %v181 = vpack.c.bf16 %v169, %v168
    %v182 = vpack.c.bf16 %v171, %v170
    %v183 = vpack.c.bf16 %v173, %v172
    %v184 = vpack.c.bf16 %v175, %v174
    %v185 = vpack.c.bf16 %v177, %v176
    %v186 = vld [vmem:[#allocation2] sm:$0xff]
    %v187 = vld [vmem:[#allocation2 + $0x8] sm:$0xff]
    %v188 = vld [vmem:[#allocation2 + $0x10] sm:$0xff]
    %v189 = vld [vmem:[#allocation2 + $0x18] sm:$0xff]
    %v190 = vld [vmem:[#allocation2 + $0x20] sm:$0xff]
    %v191 = vld [vmem:[#allocation2 + $0x28] sm:$0xff]
    %v192 = vld [vmem:[#allocation2 + $0x30] sm:$0xff]
    %v193 = vld [vmem:[#allocation2 + $0x38] sm:$0xff]
    %v194 = vld [vmem:[#allocation2 + $0x40] sm:$0xff]
    %v195 = vld [vmem:[#allocation2 + $0x48] sm:$0xff]
    %v196 = vld [vmem:[#allocation2 + $0x50] sm:$0xff]
    %v197 = vld [vmem:[#allocation2 + $0x58] sm:$0xff]
    %v198 = vld [vmem:[#allocation2 + $0x60] sm:$0xff]
    %v199 = vld [vmem:[#allocation2 + $0x68] sm:$0xff]
    %v200 = vld [vmem:[#allocation2 + $0x70] sm:$0xff]
    %v201 = vld [vmem:[#allocation2 + $0x78] sm:$0xff]
    %v202 = vld [vmem:[%s2] sm:$0xf]
    %v203 = vld [vmem:[%s2 + $0x4] sm:$0xf]
    %v204 = vld [vmem:[%s2 + $0x8] sm:$0xf]
    %v205 = vld [vmem:[%s2 + $0xc] sm:$0xf]
    %v206 = vld [vmem:[%s2 + $0x10] sm:$0xf]
    %v207 = vld [vmem:[%s2 + $0x14] sm:$0xf]
    %v208 = vld [vmem:[%s2 + $0x18] sm:$0xf]
    %v209 = vld [vmem:[%s2 + $0x1c] sm:$0xf]
    %v210 = vld [vmem:[%s2 + $0x20] sm:$0xf]
    %v211 = vld [vmem:[%s2 + $0x24] sm:$0xf]
    %v212 = vld [vmem:[%s2 + $0x28] sm:$0xf]
    %v213 = vld [vmem:[%s2 + $0x2c] sm:$0xf]
    %v214 = vld [vmem:[%s2 + $0x30] sm:$0xf]
    %v215 = vld [vmem:[%s2 + $0x34] sm:$0xf]
    %v216 = vld [vmem:[%s2 + $0x38] sm:$0xf]
    %v217 = vld [vmem:[%s2 + $0x3c] sm:$0xf]
    %v234 = vunpack.c.l.b16 %v202
    %v235 = vunpack.c.l.b16 %v203
    %v236 = vunpack.c.l.b16 %v204
    %v237 = vunpack.c.l.b16 %v205
    %v238 = vunpack.c.l.b16 %v206
    %v239 = vunpack.c.l.b16 %v207
    %v240 = vunpack.c.l.b16 %v208
    %v241 = vunpack.c.l.b16 %v209
    %v242 = vunpack.c.l.b16 %v210
    %v243 = vunpack.c.l.b16 %v211
    %v244 = vunpack.c.l.b16 %v212
    %v245 = vunpack.c.l.b16 %v213
    %v246 = vunpack.c.l.b16 %v214
    %v247 = vunpack.c.l.b16 %v215
    %v248 = vunpack.c.l.b16 %v216
    %v249 = vunpack.c.l.b16 %v217
    %v250 = vpack.c.b16 %v235, %v234
    %v251 = vpack.c.b16 %v237, %v236
    %v252 = vpack.c.b16 %v239, %v238
    %v253 = vpack.c.b16 %v241, %v240
    %v254 = vpack.c.b16 %v243, %v242
    %v255 = vpack.c.b16 %v245, %v244
    %v256 = vpack.c.b16 %v247, %v246
    %v257 = vpack.c.b16 %v249, %v248
    %266 = vmatpush.bf16.msra.mxu0 %v257
    %267 = vmatpush.bf16.msra.mxu0 %v256
    %268 = vmatpush.bf16.msra.mxu0 %v255
    %269 = vmatpush.bf16.msra.mxu0 %v254
    %270 = vmatpush.bf16.msra.mxu0 %v253
    %271 = vmatpush.bf16.msra.mxu0 %v252
    %272 = vmatpush.bf16.msra.mxu0 %v251
    %273 = vmatpush.bf16.msra.mxu0 %v250
    %274 = vmatmul.bf16.gmra.mxu0 %v178
    %v275 = vpop.f32.mrf.mxu0
    %v276 = vadd.f32 0.0, %v275
    %v277 = vpop.f32.mrf.mxu0
    %v278 = vadd.f32 0.0, %v277
    %279 = vmatmul.bf16.gmra.mxu0 %v179
    %v280 = vpop.f32.mrf.mxu0
    %v281 = vadd.f32 0.0, %v280
    %v282 = vpop.f32.mrf.mxu0
    %v283 = vadd.f32 0.0, %v282
    %284 = vmatmul.bf16.gmra.mxu0 %v180
    %v285 = vpop.f32.mrf.mxu0
    %v286 = vadd.f32 0.0, %v285
    %v287 = vpop.f32.mrf.mxu0
    %v288 = vadd.f32 0.0, %v287
    %289 = vmatmul.bf16.gmra.mxu0 %v181
    %v290 = vpop.f32.mrf.mxu0
    %v291 = vadd.f32 0.0, %v290
    %v292 = vpop.f32.mrf.mxu0
    %v293 = vadd.f32 0.0, %v292
    %294 = vmatmul.bf16.gmra.mxu0 %v182
    %v295 = vpop.f32.mrf.mxu0
    %v296 = vadd.f32 0.0, %v295
    %v297 = vpop.f32.mrf.mxu0
    %v298 = vadd.f32 0.0, %v297
    %299 = vmatmul.bf16.gmra.mxu0 %v183
    %v300 = vpop.f32.mrf.mxu0
    %v301 = vadd.f32 0.0, %v300
    %v302 = vpop.f32.mrf.mxu0
    %v303 = vadd.f32 0.0, %v302
    %304 = vmatmul.bf16.gmra.mxu0 %v184
    %v305 = vpop.f32.mrf.mxu0
    %v306 = vadd.f32 0.0, %v305
    %v307 = vpop.f32.mrf.mxu0
    %v308 = vadd.f32 0.0, %v307
    %309 = vmatmul.bf16.gmra.mxu0 %v185
    %v310 = vpop.f32.mrf.mxu0
    %v311 = vadd.f32 0.0, %v310
    %v312 = vpop.f32.mrf.mxu0
    %v313 = vadd.f32 0.0, %v312
    %314 = vdwg.mxu0
    %v315 = vadd.f32 %v186, %v276
    %v316 = vadd.f32 %v187, %v278
    %v317 = vadd.f32 %v188, %v281
    %v318 = vadd.f32 %v189, %v283
    %v319 = vadd.f32 %v190, %v286
    %v320 = vadd.f32 %v191, %v288
    %v321 = vadd.f32 %v192, %v291
    %v322 = vadd.f32 %v193, %v293
    %v323 = vadd.f32 %v194, %v296
    %v324 = vadd.f32 %v195, %v298
    %v325 = vadd.f32 %v196, %v301
    %v326 = vadd.f32 %v197, %v303
    %v327 = vadd.f32 %v198, %v306
    %v328 = vadd.f32 %v199, %v308
    %v329 = vadd.f32 %v200, %v311
    %v330 = vadd.f32 %v201, %v313
    %331 = vst [vmem:[#allocation2] sm:$0xff] %v315
    %332 = vst [vmem:[#allocation2 + $0x8] sm:$0xff] %v316
    %333 = vst [vmem:[#allocation2 + $0x10] sm:$0xff] %v317
    %334 = vst [vmem:[#allocation2 + $0x18] sm:$0xff] %v318
    %335 = vst [vmem:[#allocation2 + $0x20] sm:$0xff] %v319
    %336 = vst [vmem:[#allocation2 + $0x28] sm:$0xff] %v320
    %337 = vst [vmem:[#allocation2 + $0x30] sm:$0xff] %v321
    %338 = vst [vmem:[#allocation2 + $0x38] sm:$0xff] %v322
    %339 = vst [vmem:[#allocation2 + $0x40] sm:$0xff] %v323
    %340 = vst [vmem:[#allocation2 + $0x48] sm:$0xff] %v324
    %341 = vst [vmem:[#allocation2 + $0x50] sm:$0xff] %v325
    %342 = vst [vmem:[#allocation2 + $0x58] sm:$0xff] %v326
    %343 = vst [vmem:[#allocation2 + $0x60] sm:$0xff] %v327
    %344 = vst [vmem:[#allocation2 + $0x68] sm:$0xff] %v328
    %345 = vst [vmem:[#allocation2 + $0x70] sm:$0xff] %v329
    %346 = vst [vmem:[#allocation2 + $0x78] sm:$0xff] %v330
    // Predicated region
    $region22: #{_gcn_forward_padded.2} parent=1 // pred_check
      %p347 = pneg %p30
    $region23: #{_gcn_forward_padded.2} parent=1 // pred_check_branch
      %349 = sbr.rel (%p347) target = $region25
    $region24: #{_gcn_forward_padded.2} parent=1 // pred_region
      %v350 = vld [vmem:[#allocation2] sm:$0xff]
      %v351 = vld [vmem:[#allocation2 + $0x8] sm:$0xff]
      %v352 = vld [vmem:[#allocation2 + $0x10] sm:$0xff]
      %v353 = vld [vmem:[#allocation2 + $0x18] sm:$0xff]
      %v354 = vld [vmem:[#allocation2 + $0x20] sm:$0xff]
      %v355 = vld [vmem:[#allocation2 + $0x28] sm:$0xff]
      %v356 = vld [vmem:[#allocation2 + $0x30] sm:$0xff]
      %v357 = vld [vmem:[#allocation2 + $0x38] sm:$0xff]
      %v358 = vld [vmem:[#allocation2 + $0x40] sm:$0xff]
      %v359 = vld [vmem:[#allocation2 + $0x48] sm:$0xff]
      %v360 = vld [vmem:[#allocation2 + $0x50] sm:$0xff]
      %v361 = vld [vmem:[#allocation2 + $0x58] sm:$0xff]
      %v362 = vld [vmem:[#allocation2 + $0x60] sm:$0xff]
      %v363 = vld [vmem:[#allocation2 + $0x68] sm:$0xff]
      %v364 = vld [vmem:[#allocation2 + $0x70] sm:$0xff]
      %v365 = vld [vmem:[#allocation2 + $0x78] sm:$0xff]
      %v366 = vpack.c.bf16 %v350, %v350
      %v367 = vpack.c.bf16 %v351, %v351
      %v368 = vpack.c.bf16 %v352, %v352
      %v369 = vpack.c.bf16 %v353, %v353
      %v370 = vpack.c.bf16 %v354, %v354
      %v371 = vpack.c.bf16 %v355, %v355
      %v372 = vpack.c.bf16 %v356, %v356
      %v373 = vpack.c.bf16 %v357, %v357
      %v374 = vpack.c.bf16 %v358, %v358
      %v375 = vpack.c.bf16 %v359, %v359
      %v376 = vpack.c.bf16 %v360, %v360
      %v377 = vpack.c.bf16 %v361, %v361
      %v378 = vpack.c.bf16 %v362, %v362
      %v379 = vpack.c.bf16 %v363, %v363
      %v380 = vpack.c.bf16 %v364, %v364
      %v381 = vpack.c.bf16 %v365, %v365
      %382 = vst [vmem:[%s3] sm:$0xf] %v366
      %383 = vst [vmem:[%s3 + $0x4] sm:$0xf] %v367
      %384 = vst [vmem:[%s3 + $0x8] sm:$0xf] %v368
      %385 = vst [vmem:[%s3 + $0xc] sm:$0xf] %v369
      %386 = vst [vmem:[%s3 + $0x10] sm:$0xf] %v370
      %387 = vst [vmem:[%s3 + $0x14] sm:$0xf] %v371
      %388 = vst [vmem:[%s3 + $0x18] sm:$0xf] %v372
      %389 = vst [vmem:[%s3 + $0x1c] sm:$0xf] %v373
      %390 = vst [vmem:[%s3 + $0x20] sm:$0xf] %v374
      %391 = vst [vmem:[%s3 + $0x24] sm:$0xf] %v375
      %392 = vst [vmem:[%s3 + $0x28] sm:$0xf] %v376
      %393 = vst [vmem:[%s3 + $0x2c] sm:$0xf] %v377
      %394 = vst [vmem:[%s3 + $0x30] sm:$0xf] %v378
      %395 = vst [vmem:[%s3 + $0x34] sm:$0xf] %v379
      %396 = vst [vmem:[%s3 + $0x38] sm:$0xf] %v380
      %397 = vst [vmem:[%s3 + $0x3c] sm:$0xf] %v381
    $region25: #{_gcn_forward_padded.2} parent=1 // pred_fallthru
      _
    // Predicated region
    $region26: #{_gcn_forward_padded.2} parent=1 // pred_check
      _
    $region27: #{_gcn_forward_padded.2} parent=1 // pred_check_branch
      %399 = sbr.rel (0) target = $region29
    $region28: #{_gcn_forward_padded.2} parent=1 // pred_region
      _
    $region29: #{_gcn_forward_padded.2} parent=1 // pred_fallthru
      _
    // Predicated region
    $region30: #{_gcn_forward_padded.2} parent=1 // pred_check
      _
    $region31: #{_gcn_forward_padded.2} parent=1 // pred_check_branch
      %401 = sbr.rel (0) target = $region33
    $region32: #{_gcn_forward_padded.2} parent=1 // pred_region
      _
    $region33: #{_gcn_forward_padded.2} parent=1 // pred_fallthru
      _
    %402 = vsyncpa [#allocation4], 1

// kernel: _gcn_forward_padded.3
$region0: #{_gcn_forward_padded.3}
  #allocation0 [shape = 'u32[]', space=smem, size = 0x4, offset = 0x4, fixed_abs, tag = 'smem constant byte address 0x4 - core index']
  #allocation1 [shape = 'u32[72,128]{1,0:T(1,128)}', space=vmem, size = 0x9000, scoped, tag = 'internal scratch']
  #allocation2 [shape = 'f32[128,128]{1,0:T(8,128)}', space=vmem, size = 0x10000, scoped, tag = 'scratch operand']
  %s0 = inlined_call_operand.vmem [shape: s8[128,128], index: 0, kind: input, shape index: {}]
  %s1 = inlined_call_operand.vmem [shape: bf16[128,128], index: 1, kind: input, shape index: {}]
  %s2 = inlined_call_operand.vmem [shape: f32[128,1], index: 2, kind: input, shape index: {}]
  %s3 = inlined_call_operand.vmem [shape: f32[1,128], index: 3, kind: input, shape index: {}]
  %s4 = inlined_call_operand.hbm [shape: f32[128,128], index: 4, kind: output, shape index: {}]
  %s5 = sld [smem:[#allocation0]]
  $region34: #{_gcn_forward_padded.3} parent=0
    _
  %s7 = ssub.s32 1, %s5
  %s8 = scalar_select 0, %s7, %s5
  $region1: #{_gcn_forward_padded.3} parent=0
    #allocation3 [shape = 'u8[65536]{0}', space=vmem, size = 0x10000, scoped, tag = 'output window, operand 0, single buffered']
    #allocation4 [shape = 's32[1]{0}', space=sflag, size = 0x4, scoped, tag = 'scoped memory for _gcn_forward_padded.3']
    %9 = vsyncpa [#allocation4], 0
    // Predicated region
    $region2: #{_gcn_forward_padded.3} parent=1 // pred_check
      _
    $region3: #{_gcn_forward_padded.3} parent=1 // pred_check_branch
      %11 = sbr.rel (0) target = $region5
    $region4: #{_gcn_forward_padded.3} parent=1 // pred_region
      _
    $region5: #{_gcn_forward_padded.3} parent=1 // pred_fallthru
      _
    // Predicated region
    $region6: #{_gcn_forward_padded.3} parent=1 // pred_check
      _
    $region7: #{_gcn_forward_padded.3} parent=1 // pred_check_branch
      %13 = sbr.rel (0) target = $region9
    $region8: #{_gcn_forward_padded.3} parent=1 // pred_region
      _
    $region9: #{_gcn_forward_padded.3} parent=1 // pred_fallthru
      _
    // Predicated region
    $region10: #{_gcn_forward_padded.3} parent=1 // pred_check
      _
    $region11: #{_gcn_forward_padded.3} parent=1 // pred_check_branch
      %15 = sbr.rel (0) target = $region13
    $region12: #{_gcn_forward_padded.3} parent=1 // pred_region
      _
    $region13: #{_gcn_forward_padded.3} parent=1 // pred_fallthru
      _
    // Predicated region
    $region14: #{_gcn_forward_padded.3} parent=1 // pred_check
      _
    $region15: #{_gcn_forward_padded.3} parent=1 // pred_check_branch
      %17 = sbr.rel (0) target = $region17
    $region16: #{_gcn_forward_padded.3} parent=1 // pred_region
      _
    $region17: #{_gcn_forward_padded.3} parent=1 // pred_fallthru
      _
    %p18 = scmp.eq.s32.totalorder 0, 0
    // Predicated region
    $region18: #{_gcn_forward_padded.3} parent=1 // pred_check
      %p19 = pneg %p18
    $region19: #{_gcn_forward_padded.3} parent=1 // pred_check_branch
      %21 = sbr.rel (%p19) target = $region21
    $region20: #{_gcn_forward_padded.3} parent=1 // pred_region
      %22 = vst [vmem:[#allocation2] sm:$0xff] 0.0
      %23 = vst [vmem:[#allocation2 + $0x8] sm:$0xff] 0.0
      %24 = vst [vmem:[#allocation2 + $0x10] sm:$0xff] 0.0
      %25 = vst [vmem:[#allocation2 + $0x18] sm:$0xff] 0.0
      %26 = vst [vmem:[#allocation2 + $0x20] sm:$0xff] 0.0
      %27 = vst [vmem:[#allocation2 + $0x28] sm:$0xff] 0.0
      %28 = vst [vmem:[#allocation2 + $0x30] sm:$0xff] 0.0
      %29 = vst [vmem:[#allocation2 + $0x38] sm:$0xff] 0.0
      %30 = vst [vmem:[#allocation2 + $0x40] sm:$0xff] 0.0
      %31 = vst [vmem:[#allocation2 + $0x48] sm:$0xff] 0.0
      %32 = vst [vmem:[#allocation2 + $0x50] sm:$0xff] 0.0
      %33 = vst [vmem:[#allocation2 + $0x58] sm:$0xff] 0.0
      %34 = vst [vmem:[#allocation2 + $0x60] sm:$0xff] 0.0
      %35 = vst [vmem:[#allocation2 + $0x68] sm:$0xff] 0.0
      %36 = vst [vmem:[#allocation2 + $0x70] sm:$0xff] 0.0
      %37 = vst [vmem:[#allocation2 + $0x78] sm:$0xff] 0.0
    $region21: #{_gcn_forward_padded.3} parent=1 // pred_fallthru
      _
    %s38 = smul.u32 0, 128
    %s39 = sshra.s32 %s38, 3
    %s40 = sand.u32 %s38, 7
    %s41 = smul.addr %s39, 4
    %s42 = scalar_lea.vmem %s1, %s41
    %v43 = vld [vmem:[%s42] sm:$0xf]
    %v44 = vld [vmem:[%s42 + $0x4] sm:$0xf]
    %v45 = vld [vmem:[%s42 + $0x8] sm:$0xf]
    %v46 = vld [vmem:[%s42 + $0xc] sm:$0xf]
    %v47 = vld [vmem:[%s42 + $0x10] sm:$0xf]
    %v48 = vld [vmem:[%s42 + $0x14] sm:$0xf]
    %v49 = vld [vmem:[%s42 + $0x18] sm:$0xf]
    %v50 = vld [vmem:[%s42 + $0x1c] sm:$0xf]
    %v51 = vld [vmem:[%s42 + $0x20] sm:$0xf]
    %v52 = vld [vmem:[%s42 + $0x24] sm:$0xf]
    %v53 = vld [vmem:[%s42 + $0x28] sm:$0xf]
    %v54 = vld [vmem:[%s42 + $0x2c] sm:$0xf]
    %v55 = vld [vmem:[%s42 + $0x30] sm:$0xf]
    %v56 = vld [vmem:[%s42 + $0x34] sm:$0xf]
    %v57 = vld [vmem:[%s42 + $0x38] sm:$0xf]
    %v58 = vld [vmem:[%s42 + $0x3c] sm:$0xf]
    %v59 = vld [vmem:[%s0] sm:$0xff]
    %v60 = vld [vmem:[%s0 + $0x8] sm:$0xff]
    %v61 = vld [vmem:[%s0 + $0x10] sm:$0xff]
    %v62 = vld [vmem:[%s0 + $0x18] sm:$0xff]
    %v63 = vunpack.c.0.s8 %v59
    %v64 = vunpack.c.1.s8 %v59
    %v65 = vunpack.c.2.s8 %v59
    %v66 = vunpack.c.3.s8 %v59
    %v67 = vunpack.c.0.s8 %v60
    %v68 = vunpack.c.1.s8 %v60
    %v69 = vunpack.c.2.s8 %v60
    %v70 = vunpack.c.3.s8 %v60
    %v71 = vunpack.c.0.s8 %v61
    %v72 = vunpack.c.1.s8 %v61
    %v73 = vunpack.c.2.s8 %v61
    %v74 = vunpack.c.3.s8 %v61
    %v75 = vunpack.c.0.s8 %v62
    %v76 = vunpack.c.1.s8 %v62
    %v77 = vunpack.c.2.s8 %v62
    %v78 = vunpack.c.3.s8 %v62
    %v79 = vcvt.s32.f32 %v63
    %v80 = vcvt.s32.f32 %v64
    %v81 = vcvt.s32.f32 %v65
    %v82 = vcvt.s32.f32 %v66
    %v83 = vcvt.s32.f32 %v67
    %v84 = vcvt.s32.f32 %v68
    %v85 = vcvt.s32.f32 %v69
    %v86 = vcvt.s32.f32 %v70
    %v87 = vcvt.s32.f32 %v71
    %v88 = vcvt.s32.f32 %v72
    %v89 = vcvt.s32.f32 %v73
    %v90 = vcvt.s32.f32 %v74
    %v91 = vcvt.s32.f32 %v75
    %v92 = vcvt.s32.f32 %v76
    %v93 = vcvt.s32.f32 %v77
    %v94 = vcvt.s32.f32 %v78
    %v95 = vpack.c.bf16 %v80, %v79
    %v96 = vpack.c.bf16 %v82, %v81
    %v97 = vpack.c.bf16 %v84, %v83
    %v98 = vpack.c.bf16 %v86, %v85
    %v99 = vpack.c.bf16 %v88, %v87
    %v100 = vpack.c.bf16 %v90, %v89
    %v101 = vpack.c.bf16 %v92, %v91
    %v102 = vpack.c.bf16 %v94, %v93
    %v103 = vld [vmem:[#allocation2] sm:$0xff]
    %v104 = vld [vmem:[#allocation2 + $0x8] sm:$0xff]
    %v105 = vld [vmem:[#allocation2 + $0x10] sm:$0xff]
    %v106 = vld [vmem:[#allocation2 + $0x18] sm:$0xff]
    %v107 = vld [vmem:[#allocation2 + $0x20] sm:$0xff]
    %v108 = vld [vmem:[#allocation2 + $0x28] sm:$0xff]
    %v109 = vld [vmem:[#allocation2 + $0x30] sm:$0xff]
    %v110 = vld [vmem:[#allocation2 + $0x38] sm:$0xff]
    %v111 = vld [vmem:[#allocation2 + $0x40] sm:$0xff]
    %v112 = vld [vmem:[#allocation2 + $0x48] sm:$0xff]
    %v113 = vld [vmem:[#allocation2 + $0x50] sm:$0xff]
    %v114 = vld [vmem:[#allocation2 + $0x58] sm:$0xff]
    %v115 = vld [vmem:[#allocation2 + $0x60] sm:$0xff]
    %v116 = vld [vmem:[#allocation2 + $0x68] sm:$0xff]
    %v117 = vld [vmem:[#allocation2 + $0x70] sm:$0xff]
    %v118 = vld [vmem:[#allocation2 + $0x78] sm:$0xff]
    %v135 = vunpack.c.l.b16 %v43
    %v136 = vunpack.c.l.b16 %v44
    %v137 = vunpack.c.l.b16 %v45
    %v138 = vunpack.c.l.b16 %v46
    %v139 = vunpack.c.l.b16 %v47
    %v140 = vunpack.c.l.b16 %v48
    %v141 = vunpack.c.l.b16 %v49
    %v142 = vunpack.c.l.b16 %v50
    %v143 = vunpack.c.l.b16 %v51
    %v144 = vunpack.c.l.b16 %v52
    %v145 = vunpack.c.l.b16 %v53
    %v146 = vunpack.c.l.b16 %v54
    %v147 = vunpack.c.l.b16 %v55
    %v148 = vunpack.c.l.b16 %v56
    %v149 = vunpack.c.l.b16 %v57
    %v150 = vunpack.c.l.b16 %v58
    %v151 = vpack.c.b16 %v136, %v135
    %v152 = vpack.c.b16 %v138, %v137
    %v153 = vpack.c.b16 %v140, %v139
    %v154 = vpack.c.b16 %v142, %v141
    %v155 = vpack.c.b16 %v144, %v143
    %v156 = vpack.c.b16 %v146, %v145
    %v157 = vpack.c.b16 %v148, %v147
    %v158 = vpack.c.b16 %v150, %v149
    %167 = vmatpush.bf16.msra.mxu0 %v158
    %168 = vmatpush.bf16.msra.mxu0 %v157
    %169 = vmatpush.bf16.msra.mxu0 %v156
    %170 = vmatpush.bf16.msra.mxu0 %v155
    %171 = vmatpush.bf16.msra.mxu0 %v154
    %172 = vmatpush.bf16.msra.mxu0 %v153
    %173 = vmatpush.bf16.msra.mxu0 %v152
    %174 = vmatpush.bf16.msra.mxu0 %v151
    %175 = vmatmul.bf16.gmra.mxu0 %v95
    %v176 = vpop.f32.mrf.mxu0
    %v177 = vadd.f32 0.0, %v176
    %v178 = vpop.f32.mrf.mxu0
    %v179 = vadd.f32 0.0, %v178
    %180 = vmatmul.bf16.gmra.mxu0 %v96
    %v181 = vpop.f32.mrf.mxu0
    %v182 = vadd.f32 0.0, %v181
    %v183 = vpop.f32.mrf.mxu0
    %v184 = vadd.f32 0.0, %v183
    %185 = vmatmul.bf16.gmra.mxu0 %v97
    %v186 = vpop.f32.mrf.mxu0
    %v187 = vadd.f32 0.0, %v186
    %v188 = vpop.f32.mrf.mxu0
    %v189 = vadd.f32 0.0, %v188
    %190 = vmatmul.bf16.gmra.mxu0 %v98
    %v191 = vpop.f32.mrf.mxu0
    %v192 = vadd.f32 0.0, %v191
    %v193 = vpop.f32.mrf.mxu0
    %v194 = vadd.f32 0.0, %v193
    %195 = vmatmul.bf16.gmra.mxu0 %v99
    %v196 = vpop.f32.mrf.mxu0
    %v197 = vadd.f32 0.0, %v196
    %v198 = vpop.f32.mrf.mxu0
    %v199 = vadd.f32 0.0, %v198
    %200 = vmatmul.bf16.gmra.mxu0 %v100
    %v201 = vpop.f32.mrf.mxu0
    %v202 = vadd.f32 0.0, %v201
    %v203 = vpop.f32.mrf.mxu0
    %v204 = vadd.f32 0.0, %v203
    %205 = vmatmul.bf16.gmra.mxu0 %v101
    %v206 = vpop.f32.mrf.mxu0
    %v207 = vadd.f32 0.0, %v206
    %v208 = vpop.f32.mrf.mxu0
    %v209 = vadd.f32 0.0, %v208
    %210 = vmatmul.bf16.gmra.mxu0 %v102
    %v211 = vpop.f32.mrf.mxu0
    %v212 = vadd.f32 0.0, %v211
    %v213 = vpop.f32.mrf.mxu0
    %v214 = vadd.f32 0.0, %v213
    %215 = vdwg.mxu0
    %v216 = vadd.f32 %v103, %v177
    %v217 = vadd.f32 %v104, %v179
    %v218 = vadd.f32 %v105, %v182
    %v219 = vadd.f32 %v106, %v184
    %v220 = vadd.f32 %v107, %v187
    %v221 = vadd.f32 %v108, %v189
    %v222 = vadd.f32 %v109, %v192
    %v223 = vadd.f32 %v110, %v194
    %v224 = vadd.f32 %v111, %v197
    %v225 = vadd.f32 %v112, %v199
    %v226 = vadd.f32 %v113, %v202
    %v227 = vadd.f32 %v114, %v204
    %v228 = vadd.f32 %v115, %v207
    %v229 = vadd.f32 %v116, %v209
    %v230 = vadd.f32 %v117, %v212
    %v231 = vadd.f32 %v118, %v214
    %232 = vst [vmem:[#allocation2] sm:$0xff] %v216
    %233 = vst [vmem:[#allocation2 + $0x8] sm:$0xff] %v217
    %234 = vst [vmem:[#allocation2 + $0x10] sm:$0xff] %v218
    %235 = vst [vmem:[#allocation2 + $0x18] sm:$0xff] %v219
    %236 = vst [vmem:[#allocation2 + $0x20] sm:$0xff] %v220
    %237 = vst [vmem:[#allocation2 + $0x28] sm:$0xff] %v221
    %238 = vst [vmem:[#allocation2 + $0x30] sm:$0xff] %v222
    %239 = vst [vmem:[#allocation2 + $0x38] sm:$0xff] %v223
    %240 = vst [vmem:[#allocation2 + $0x40] sm:$0xff] %v224
    %241 = vst [vmem:[#allocation2 + $0x48] sm:$0xff] %v225
    %242 = vst [vmem:[#allocation2 + $0x50] sm:$0xff] %v226
    %243 = vst [vmem:[#allocation2 + $0x58] sm:$0xff] %v227
    %244 = vst [vmem:[#allocation2 + $0x60] sm:$0xff] %v228
    %245 = vst [vmem:[#allocation2 + $0x68] sm:$0xff] %v229
    %246 = vst [vmem:[#allocation2 + $0x70] sm:$0xff] %v230
    %247 = vst [vmem:[#allocation2 + $0x78] sm:$0xff] %v231
    // Predicated region
    $region22: #{_gcn_forward_padded.3} parent=1 // pred_check
      %p248 = pneg %p18
    $region23: #{_gcn_forward_padded.3} parent=1 // pred_check_branch
      %250 = sbr.rel (%p248) target = $region25
    $region24: #{_gcn_forward_padded.3} parent=1 // pred_region
      %v251 = vld [vmem:[#allocation2] sm:$0xff]
      %v252 = vld [vmem:[#allocation2 + $0x8] sm:$0xff]
      %v253 = vld [vmem:[#allocation2 + $0x10] sm:$0xff]
      %v254 = vld [vmem:[#allocation2 + $0x18] sm:$0xff]
      %v255 = vld [vmem:[#allocation2 + $0x20] sm:$0xff]
      %v256 = vld [vmem:[#allocation2 + $0x28] sm:$0xff]
      %v257 = vld [vmem:[#allocation2 + $0x30] sm:$0xff]
      %v258 = vld [vmem:[#allocation2 + $0x38] sm:$0xff]
      %v259 = vld [vmem:[#allocation2 + $0x40] sm:$0xff]
      %v260 = vld [vmem:[#allocation2 + $0x48] sm:$0xff]
      %v261 = vld [vmem:[#allocation2 + $0x50] sm:$0xff]
      %v262 = vld [vmem:[#allocation2 + $0x58] sm:$0xff]
      %v263 = vld [vmem:[#allocation2 + $0x60] sm:$0xff]
      %v264 = vld [vmem:[#allocation2 + $0x68] sm:$0xff]
      %v265 = vld [vmem:[#allocation2 + $0x70] sm:$0xff]
      %v266 = vld [vmem:[#allocation2 + $0x78] sm:$0xff]
      %v267 = vld [vmem:[%s2] sm:$0xff]
      %v268 = vld [vmem:[%s2 + $0x8] sm:$0xff]
      %v269 = vld [vmem:[%s2 + $0x10] sm:$0xff]
      %v270 = vld [vmem:[%s2 + $0x18] sm:$0xff]
      %v271 = vld [vmem:[%s2 + $0x20] sm:$0xff]
      %v272 = vld [vmem:[%s2 + $0x28] sm:$0xff]
      %v273 = vld [vmem:[%s2 + $0x30] sm:$0xff]
      %v274 = vld [vmem:[%s2 + $0x38] sm:$0xff]
      %v275 = vld [vmem:[%s2 + $0x40] sm:$0xff]
      %v276 = vld [vmem:[%s2 + $0x48] sm:$0xff]
      %v277 = vld [vmem:[%s2 + $0x50] sm:$0xff]
      %v278 = vld [vmem:[%s2 + $0x58] sm:$0xff]
      %v279 = vld [vmem:[%s2 + $0x60] sm:$0xff]
      %v280 = vld [vmem:[%s2 + $0x68] sm:$0xff]
      %v281 = vld [vmem:[%s2 + $0x70] sm:$0xff]
      %v282 = vld [vmem:[%s2 + $0x78] sm:$0xff]
      %284 = vset.pattern.permute.xlu0 0
      %285 = vperm.xlu0 %284, %v267
      %v286 = vpop.permute.xlu0 %285
      %289 = vset.pattern.permute.xlu0 0
      %290 = vperm.xlu0 %289, %v268
      %v291 = vpop.permute.xlu0 %290
      %294 = vset.pattern.permute.xlu0 0
      %295 = vperm.xlu0 %294, %v269
      %v296 = vpop.permute.xlu0 %295
      %299 = vset.pattern.permute.xlu0 0
      %300 = vperm.xlu0 %299, %v270
      %v301 = vpop.permute.xlu0 %300
      %304 = vset.pattern.permute.xlu0 0
      %305 = vperm.xlu0 %304, %v271
      %v306 = vpop.permute.xlu0 %305
      %309 = vset.pattern.permute.xlu0 0
      %310 = vperm.xlu0 %309, %v272
      %v311 = vpop.permute.xlu0 %310
      %314 = vset.pattern.permute.xlu0 0
      %315 = vperm.xlu0 %314, %v273
      %v316 = vpop.permute.xlu0 %315
      %319 = vset.pattern.permute.xlu0 0
      %320 = vperm.xlu0 %319, %v274
      %v321 = vpop.permute.xlu0 %320
      %324 = vset.pattern.permute.xlu0 0
      %325 = vperm.xlu0 %324, %v275
      %v326 = vpop.permute.xlu0 %325
      %329 = vset.pattern.permute.xlu0 0
      %330 = vperm.xlu0 %329, %v276
      %v331 = vpop.permute.xlu0 %330
      %334 = vset.pattern.permute.xlu0 0
      %335 = vperm.xlu0 %334, %v277
      %v336 = vpop.permute.xlu0 %335
      %339 = vset.pattern.permute.xlu0 0
      %340 = vperm.xlu0 %339, %v278
      %v341 = vpop.permute.xlu0 %340
      %344 = vset.pattern.permute.xlu0 0
      %345 = vperm.xlu0 %344, %v279
      %v346 = vpop.permute.xlu0 %345
      %349 = vset.pattern.permute.xlu0 0
      %350 = vperm.xlu0 %349, %v280
      %v351 = vpop.permute.xlu0 %350
      %354 = vset.pattern.permute.xlu0 0
      %355 = vperm.xlu0 %354, %v281
      %v356 = vpop.permute.xlu0 %355
      %359 = vset.pattern.permute.xlu0 0
      %360 = vperm.xlu0 %359, %v282
      %v361 = vpop.permute.xlu0 %360
      %v363 = vmul.f32 %v251, %v286
      %v364 = vmul.f32 %v252, %v291
      %v365 = vmul.f32 %v253, %v296
      %v366 = vmul.f32 %v254, %v301
      %v367 = vmul.f32 %v255, %v306
      %v368 = vmul.f32 %v256, %v311
      %v369 = vmul.f32 %v257, %v316
      %v370 = vmul.f32 %v258, %v321
      %v371 = vmul.f32 %v259, %v326
      %v372 = vmul.f32 %v260, %v331
      %v373 = vmul.f32 %v261, %v336
      %v374 = vmul.f32 %v262, %v341
      %v375 = vmul.f32 %v263, %v346
      %v376 = vmul.f32 %v264, %v351
      %v377 = vmul.f32 %v265, %v356
      %v378 = vmul.f32 %v266, %v361
      %v379 = vld [vmem:[%s3] sm:$0x1]
      %v381 = vperm.slane %v379, 0
      %v383 = vadd.f32 %v363, %v381
      %v384 = vadd.f32 %v364, %v381
      %v385 = vadd.f32 %v365, %v381
      %v386 = vadd.f32 %v366, %v381
      %v387 = vadd.f32 %v367, %v381
      %v388 = vadd.f32 %v368, %v381
      %v389 = vadd.f32 %v369, %v381
      %v390 = vadd.f32 %v370, %v381
      %v391 = vadd.f32 %v371, %v381
      %v392 = vadd.f32 %v372, %v381
      %v393 = vadd.f32 %v373, %v381
      %v394 = vadd.f32 %v374, %v381
      %v395 = vadd.f32 %v375, %v381
      %v396 = vadd.f32 %v376, %v381
      %v397 = vadd.f32 %v377, %v381
      %v398 = vadd.f32 %v378, %v381
      %399 = vst [vmem:[#allocation3] sm:$0xff] %v383
      %400 = vst [vmem:[#allocation3 + $0x8] sm:$0xff] %v384
      %401 = vst [vmem:[#allocation3 + $0x10] sm:$0xff] %v385
      %402 = vst [vmem:[#allocation3 + $0x18] sm:$0xff] %v386
      %403 = vst [vmem:[#allocation3 + $0x20] sm:$0xff] %v387
      %404 = vst [vmem:[#allocation3 + $0x28] sm:$0xff] %v388
      %405 = vst [vmem:[#allocation3 + $0x30] sm:$0xff] %v389
      %406 = vst [vmem:[#allocation3 + $0x38] sm:$0xff] %v390
      %407 = vst [vmem:[#allocation3 + $0x40] sm:$0xff] %v391
      %408 = vst [vmem:[#allocation3 + $0x48] sm:$0xff] %v392
      %409 = vst [vmem:[#allocation3 + $0x50] sm:$0xff] %v393
      %410 = vst [vmem:[#allocation3 + $0x58] sm:$0xff] %v394
      %411 = vst [vmem:[#allocation3 + $0x60] sm:$0xff] %v395
      %412 = vst [vmem:[#allocation3 + $0x68] sm:$0xff] %v396
      %413 = vst [vmem:[#allocation3 + $0x70] sm:$0xff] %v397
      %414 = vst [vmem:[#allocation3 + $0x78] sm:$0xff] %v398
    $region25: #{_gcn_forward_padded.3} parent=1 // pred_fallthru
      _
    // Predicated region
    $region26: #{_gcn_forward_padded.3} parent=1 // pred_check
      _
    $region27: #{_gcn_forward_padded.3} parent=1 // pred_check_branch
      %416 = sbr.rel (0) target = $region29
    $region28: #{_gcn_forward_padded.3} parent=1 // pred_region
      %418 = vsyncadd [#allocation4], 0
      %s419 = sshll.u32 [#allocation3], 4
      %s420 = int_to_ptr.vmem [resolvable:$true] %s419
      %s421 = sshll.u32 %s4, 4
      %s422 = int_to_ptr.hbm [resolvable:$true] %s421
      %427 = dma.vmem_to_hbm [thread:$0]  %s420, 2048, %s422, [#allocation4], 128, 128, 8
    $region29: #{_gcn_forward_padded.3} parent=1 // pred_fallthru
      _
    // Predicated region
    $region30: #{_gcn_forward_padded.3} parent=1 // pred_check
      _
    $region31: #{_gcn_forward_padded.3} parent=1 // pred_check_branch
      %429 = sbr.rel (0) target = $region33
    $region32: #{_gcn_forward_padded.3} parent=1 // pred_region
      %431 = dma.done [#allocation4], 2048
    $region33: #{_gcn_forward_padded.3} parent=1 // pred_fallthru
      _
    %432 = vsyncpa [#allocation4], 1

</llo_original>
